<compile_context>
chip_gen: v7x
topology: tpu7x:2x2x1
jax: 0.10.0
libtpu: 0.0.40
codegen_flags: <defaults>
</compile_context>

<pallas_src>
import functools
import math

import jax
import jax.numpy as jnp
from jax.experimental import pallas as pl
from jax.experimental.pallas import tpu as pltpu


def _round_up(x, m):
    return ((x + m - 1) // m) * m


def _vmem_limit_bytes(block_bytes_per_step):
    # Pallas double-buffers every block; add ~50% headroom for compiler scratch /
    # relayouts and clamp to a range valid on all generations (v7x physical = 64 MiB).
    need = int(2 * block_bytes_per_step * 1.5)
    return max(min(need, 64 << 20), 16 << 20)


# --------------------------------------------------------------------------------------
# Kernel 1: fused K/V projection over flattened key_value_states rows.
#   One MXU dot per row tile against [Wk^T | Wv^T]; K/V split at the outputs.
# --------------------------------------------------------------------------------------
def _kv_proj_kernel(kv_ref, wkv_ref, k_ref, v_ref, *, d_attn):
    x = kv_ref[...]                                        # (tm, d_model), native dtype
    kv = jnp.dot(x, wkv_ref[...], preferred_element_type=jnp.float32)  # (tm, 2*d_attn)
    k_ref[...] = kv[:, :d_attn].astype(k_ref.dtype)
    v_ref[...] = kv[:, d_attn:].astype(v_ref.dtype)


# --------------------------------------------------------------------------------------
# Kernel 2: fused LayerNorm + Q projection + cross-attention + O projection + residual.
# --------------------------------------------------------------------------------------
def _cross_attn_kernel(*refs, num_heads, d_kv, scale, eps, has_mask, has_bias):
    # ref order: x, ln_w, Wq^T, K, V, [mask], [bias], Wo^T, out
    x_ref, lnw_ref, wq_ref, k_ref, v_ref = refs[:5]
    i = 5
    mask_ref = None
    bias_ref = None
    if has_mask:
        mask_ref = refs[i]
        i += 1
    if has_bias:
        bias_ref = refs[i]
        i += 1
    wo_ref, o_ref = refs[i], refs[i + 1]

    x = x_ref[...]                                         # (tq, d_model)
    xf = x.astype(jnp.float32)

    # T5 RMS LayerNorm in f32.  The 1/sqrt(d_kv) attention scale is folded into the
    # (1, d_model) LN weight (essentially free) so q comes out already scaled.
    var = jnp.mean(xf * xf, axis=-1, keepdims=True)
    xn = xf * jax.lax.rsqrt(var + eps)
    xn = (lnw_ref[...].astype(jnp.float32) * scale) * xn

    # Q projection on the MXU in the weight's native dtype, f32 accumulate.
    q = jnp.dot(xn.astype(wq_ref.dtype), wq_ref[...],
                preferred_element_type=jnp.float32)        # (tq, d_attn), pre-scaled

    k = k_ref[...]                                         # (Skv, d_attn)
    v = v_ref[...]                                         # (Skv, d_attn)

    if has_mask:
        # Additive mask bias computed ONCE per tile (not per head).  Post-softmax this is
        # numerically identical to the reference's s*mask + (-10000*(1-mask)) because
        # exp(-10000 + s - max) underflows to exactly 0 in f32.
        neg = -10000.0 * (1.0 - mask_ref[...].astype(jnp.float32))    # (tq, Skv)

    dn = (((1,), (1,)), ((), ()))    # contract last dims: A @ B^T without a transpose op
    ctx_heads = []
    # Static loop over heads; only the small (tq, d_kv) per-head contexts stay live past
    # each iteration (score/prob temporaries are dead after use).
    # TODO(synk): for d_kv < 128 production configs, process heads in pairs so Q/K/V lane
    # slices and slab writes are 128-lane aligned.
    for h in range(num_heads):
        lo = h * d_kv
        qh = q[:, lo:lo + d_kv].astype(k.dtype)            # (tq, d_kv)
        kh = k[:, lo:lo + d_kv]                            # (Skv, d_kv)
        vh = v[:, lo:lo + d_kv]                            # (Skv, d_kv)

        s = jax.lax.dot_general(qh, kh, dn,
                                preferred_element_type=jnp.float32)   # (tq, Skv)
        if has_mask:
            s = s + neg
        if has_bias:
            s = s + bias_ref[h].astype(jnp.float32)

        # Softmax with deferred normalization: normalize the (tq, d_kv) context instead
        # of the (tq, Skv) probabilities.
        s_max = jnp.max(s, axis=-1, keepdims=True)
        p = jnp.exp(s - s_max)
        l = jnp.sum(p, axis=-1, keepdims=True)             # (tq, 1)
        ctx = jnp.dot(p.astype(vh.dtype), vh,
                      preferred_element_type=jnp.float32)  # (tq, d_kv)
        ctx = ctx * pl.reciprocal(l, approx=False)         # approx=True is viable too
        ctx_heads.append(ctx)

    # Single full-depth output projection (d_attn contraction) instead of H d_kv-deep
    # dots: full MXU depth utilization and one accumulation.
    ctx_all = jnp.concatenate(ctx_heads, axis=-1)          # (tq, d_attn) f32
    attn_out = jnp.dot(ctx_all.astype(wo_ref.dtype), wo_ref[...],
                       preferred_element_type=jnp.float32) # (tq, d_model)

    # residual add (dropout is identity in eval mode)
    o_ref[...] = (xf + attn_out).astype(o_ref.dtype)


# --------------------------------------------------------------------------------------
# Wrapper
# --------------------------------------------------------------------------------------
def parallel_cross_attention(hidden_states, key_value_states, attention_mask,
                             ln_weight, wq_t, wkv_t, wo_t, *,
                             num_heads, d_kv, attn_scale=True, eps=1e-6,
                             position_bias=None, return_present_kv=True):
    """hidden_states: [B, Sq, d_model]; key_value_states: [B, Skv, d_model];
    attention_mask: [B, 1, Sq, Skv] (1 = attend, 0 = masked) or None;
    wq_t: [d_model, d_attn]; wkv_t: [d_model, 2*d_attn] = [Wk^T | Wv^T];
    wo_t: [d_attn, d_model]   (all pre-transposed / concatenated ONCE at model-load time).
    Returns (output [B,Sq,d_model], present_key_value [2,B,H,Skv,d_kv] or None, position_bias)."""
    B, Sq, d_model = hidden_states.shape
    _, Skv, _ = key_value_states.shape
    d_attn = num_heads * d_kv
    dtype = hidden_states.dtype
    itemsize = jnp.dtype(dtype).itemsize

    has_mask = attention_mask is not None
    has_bias = position_bias is not None   # zero bias (cross-attn) is specialized away

    # ---------------- K/V projection kernel (one fused [Wk|Wv] dot per tile) ----------
    Mkv = B * Skv
    tm_kv = 512 if Mkv >= 512 else _round_up(Mkv, 8)
    Mkv_p = _round_up(Mkv, tm_kv)
    kv2d = key_value_states.reshape(Mkv, d_model)
    if Mkv_p != Mkv:
        kv2d = jnp.pad(kv2d, ((0, Mkv_p - Mkv), (0, 0)))

    kv_blk = (tm_kv * d_model + d_model * 2 * d_attn + 2 * tm_kv * d_attn) * itemsize
    k2d, v2d = pl.pallas_call(
        functools.partial(_kv_proj_kernel, d_attn=d_attn),
        out_shape=(jax.ShapeDtypeStruct((Mkv_p, d_attn), dtype),
                   jax.ShapeDtypeStruct((Mkv_p, d_attn), dtype)),
        grid_spec=pltpu.PrefetchScalarGridSpec(
            num_scalar_prefetch=0,
            grid=(Mkv_p // tm_kv,),
            in_specs=[
                pl.BlockSpec((tm_kv, d_model), lambda i: (i, 0)),
                pl.BlockSpec((d_model, 2 * d_attn), lambda i: (0, 0)),
            ],
            out_specs=(pl.BlockSpec((tm_kv, d_attn), lambda i: (i, 0)),
                       pl.BlockSpec((tm_kv, d_attn), lambda i: (i, 0))),
        ),
        compiler_params=pltpu.CompilerParams(
            dimension_semantics=("parallel",),
            vmem_limit_bytes=_vmem_limit_bytes(kv_blk)),
    )(kv2d, wkv_t)

    k3d = k2d[:Mkv].reshape(B, Skv, d_attn)
    v3d = v2d[:Mkv].reshape(B, Skv, d_attn)

    # ---------------- fused LN + Q + attention + O + residual ----------------
    # q tile: as large as possible, but keep >= 2 parallel grid steps when possible so
    # both v7x TensorCores get work even at batch == 1 (no-op on v5e/v6e).
    tq = 256 if Sq >= 256 else _round_up(Sq, 8)
    if B == 1 and Sq > 8 and Sq <= tq:
        tq = _round_up((Sq + 1) // 2, 8)
    Sq_p = _round_up(Sq, tq)

    x = hidden_states
    if Sq_p != Sq:
        x = jnp.pad(x, ((0, 0), (0, Sq_p - Sq), (0, 0)))

    operands = [x, ln_weight.reshape(1, d_model), wq_t, k3d, v3d]
    in_specs = [
        pl.BlockSpec((None, tq, d_model), lambda b, i: (b, i, 0)),        # hidden tile
        pl.BlockSpec((1, d_model), lambda b, i: (0, 0)),                  # LN weight
        pl.BlockSpec((d_model, d_attn), lambda b, i: (0, 0)),             # Wq^T
        pl.BlockSpec((None, Skv, d_attn), lambda b, i: (b, 0, 0)),        # K
        pl.BlockSpec((None, Skv, d_attn), lambda b, i: (b, 0, 0)),        # V
    ]

    blk = (2 * tq * d_model + d_model + d_model * d_attn
           + 2 * Skv * d_attn + d_attn * d_model) * itemsize

    if has_mask:
        # Stream the mask at the activations' dtype (bf16 in real models -> half the bytes).
        mask = jnp.broadcast_to(attention_mask, (B, 1, Sq, Skv)).astype(dtype)
        if Sq_p != Sq:
            mask = jnp.pad(mask, ((0, 0), (0, 0), (0, Sq_p - Sq), (0, 0)))
        operands.append(mask)
        in_specs.append(pl.BlockSpec((None, None, tq, Skv), lambda b, i: (b, 0, i, 0)))
        blk += tq * Skv * itemsize
    if has_bias:
        bias = jnp.broadcast_to(position_bias, (1, num_heads, Sq, Skv)).astype(jnp.float32)
        if Sq_p != Sq:
            bias = jnp.pad(bias, ((0, 0), (0, 0), (0, Sq_p - Sq), (0, 0)))
        operands.append(bias)
        in_specs.append(pl.BlockSpec((None, num_heads, tq, Skv), lambda b, i: (0, 0, i, 0)))
        blk += num_heads * tq * Skv * 4

    operands.append(wo_t)
    in_specs.append(pl.BlockSpec((d_attn, d_model), lambda b, i: (0, 0)))  # Wo^T

    scale = (1.0 / math.sqrt(d_kv)) if attn_scale else 1.0
    kernel = functools.partial(_cross_attn_kernel, num_heads=num_heads, d_kv=d_kv,
                               scale=scale, eps=eps, has_mask=has_mask, has_bias=has_bias)

    out = pl.pallas_call(
        kernel,
        out_shape=jax.ShapeDtypeStruct((B, Sq_p, d_model), dtype),
        grid_spec=pltpu.PrefetchScalarGridSpec(
            num_scalar_prefetch=0,
            grid=(B, Sq_p // tq),
            in_specs=in_specs,
            out_specs=pl.BlockSpec((None, tq, d_model), lambda b, i: (b, i, 0)),
        ),
        compiler_params=pltpu.CompilerParams(
            dimension_semantics=("parallel", "parallel"),
            vmem_limit_bytes=_vmem_limit_bytes(blk)),
    )(*operands)

    if Sq_p != Sq:
        out = out[:, :Sq, :]

    present_kv = None
    if return_present_kv:
        # TODO(synk): emit head-major K/V directly from the projection kernel (grid over
        # (B, Skv-tiles)) to avoid this extra XLA reshape/transpose HBM pass for large Skv.
        k4 = k3d.reshape(B, Skv, num_heads, d_kv).transpose(0, 2, 1, 3)
        v4 = v3d.reshape(B, Skv, num_heads, d_kv).transpose(0, 2, 1, 3)
        present_kv = jnp.stack([k4, v4], axis=0)

    # position_bias is returned as given; the zero-bias tensor the torch module would
    # fabricate is never materialized (it is specialized out of the kernel).
    return out, present_kv, position_bias


# --------------------------------------------------------------------------------------
# Pure-JAX reference (mirrors the PyTorch module exactly), for correctness check.
# --------------------------------------------------------------------------------------
def _reference(hidden, kv, mask, ln_w, wq, wk, wv, wo, *, num_heads, d_kv,
               attn_scale, eps):
    B, Sq, d_model = hidden.shape
    _, Skv, _ = kv.shape
    xf = hidden.astype(jnp.float32)
    var = jnp.mean(xf * xf, axis=-1, keepdims=True)
    xn = ln_w * (hidden * jax.lax.rsqrt(var + eps))
    q = xn @ wq.T
    k = kv @ wk.T
    v = kv @ wv.T

    def split(t):
        return t.reshape(t.shape[0], t.shape[1], num_heads, d_kv).transpose(0, 2, 1, 3)

    qh, kh, vh = split(q), split(k), split(v)
    s = jnp.einsum('bhqd,bhkd->bhqk', qh, kh)
    if attn_scale:
        s = s / math.sqrt(d_kv)
    s = s * mask + (-10000.0 * (1.0 - mask))          # position_bias == 0
    p = jax.nn.softmax(s, axis=-1)
    ctx = jnp.einsum('bhqk,bhkd->bhqd', p, vh)
    ctx = ctx.transpose(0, 2, 1, 3).reshape(B, Sq, num_heads * d_kv)
    return hidden + ctx @ wo.T


if __name__ == "__main__":
    # Small config: d_model=32, num_heads=4, d_kv=8, batch=2, q-seq=8, kv-seq=16
    B, Sq, Skv = 2, 8, 16
    d_model, num_heads, d_kv = 32, 4, 8
    d_attn = num_heads * d_kv

    key = jax.random.PRNGKey(0)
    ks = jax.random.split(key, 8)
    hidden = jax.random.normal(ks[0], (B, Sq, d_model), dtype=jnp.float32)
    kv_states = jax.random.normal(ks[1], (B, Skv, d_model), dtype=jnp.float32)
    # nn.Linear weight layouts: [out_features, in_features]
    wq = jax.random.normal(ks[2], (d_attn, d_model), dtype=jnp.float32) * 0.05
    wk = jax.random.normal(ks[3], (d_attn, d_model), dtype=jnp.float32) * 0.05
    wv = jax.random.normal(ks[4], (d_attn, d_model), dtype=jnp.float32) * 0.05
    wo = jax.random.normal(ks[5], (d_model, d_attn), dtype=jnp.float32) * 0.05
    ln_w = 1.0 + 0.1 * jax.random.normal(ks[6], (d_model,), dtype=jnp.float32)

    # attention mask [B, 1, Sq, Skv]: batch 1 cannot attend to the last 4 keys
    mask = jnp.ones((B, 1, Sq, Skv), dtype=jnp.float32)
    mask = mask.at[1, :, :, Skv - 4:].set(0.0)

    # One-time (model-load) weight transposes / K-V concatenation — not per-call.
    wq_t = wq.T
    wkv_t = jnp.concatenate([wk.T, wv.T], axis=1)       # (d_model, 2*d_attn)
    wo_t = wo.T

    out, present_kv, pos_bias = parallel_cross_attention(
        hidden, kv_states, mask, ln_w, wq_t, wkv_t, wo_t,
        num_heads=num_heads, d_kv=d_kv, attn_scale=True, eps=1e-6,
        position_bias=None, return_present_kv=True)
    out = jax.block_until_ready(out)

    ref = _reference(hidden, kv_states, mask, ln_w, wq, wk, wv, wo,
                     num_heads=num_heads, d_kv=d_kv, attn_scale=True, eps=1e-6)

    assert out.shape == (B, Sq, d_model)
    assert present_kv.shape == (2, B, num_heads, Skv, d_kv)
    assert pos_bias is None  # zero cross-attn bias never materialized
    assert jnp.allclose(out, ref, atol=2e-4, rtol=2e-4), \
        f"mismatch vs reference, max abs err = {float(jnp.max(jnp.abs(out - ref)))}"

    print("KERNEL_OK")
</pallas_src>

<mosaic_0001>
module attributes {stable_mosaic.version = 11 : i64} {
  func.func @_kv_proj_kernel(%arg0: i32, %arg1: memref<32x32xf32, #tpu.memory_space<vmem>>, %arg2: memref<32x64xf32, #tpu.memory_space<vmem>>, %arg3: memref<32x32xf32, #tpu.memory_space<vmem>>, %arg4: memref<32x32xf32, #tpu.memory_space<vmem>>) attributes {dimension_semantics = [#tpu.dimension_semantics<parallel>], iteration_bounds = array<i64: 1>, scalar_prefetch = 0 : i64, scratch_operands = 0 : i64, tpu.core_type = #tpu.core_type<tc>, window_params = [{transform_indices = @transform_0, window_bounds = array<i64: 32, 32>}, {pipeline_mode = #tpu.pipeline_mode<synchronous>, transform_indices = @transform_1, window_bounds = array<i64: 32, 64>}, {transform_indices = @transform_2, window_bounds = array<i64: 32, 32>}, {transform_indices = @transform_3, window_bounds = array<i64: 32, 32>}]} {
    %c0 = arith.constant 0 : index
    %c0_0 = arith.constant 0 : index
    %0 = vector.load %arg1[%c0, %c0_0] : memref<32x32xf32, #tpu.memory_space<vmem>>, vector<32x32xf32>
    %c0_1 = arith.constant 0 : index
    %c0_2 = arith.constant 0 : index
    %1 = vector.load %arg2[%c0_1, %c0_2] : memref<32x64xf32, #tpu.memory_space<vmem>>, vector<32x64xf32>
    %cst = arith.constant dense<0.000000e+00> : vector<32x64xf32>
    %2 = tpu.matmul %0, %1, %cst {dimension_numbers = #tpu.dot_dimension_numbers<[1], [0], [0], [1], [0, 0, 1, 1], [], []>} : vector<32x32xf32>, vector<32x64xf32>, vector<32x64xf32> -> vector<32x64xf32>
    %3 = vector.extract_strided_slice %2 {offsets = [0, 0], sizes = [32, 32], strides = [1, 1]} : vector<32x64xf32> to vector<32x32xf32>
    %c0_3 = arith.constant 0 : index
    %c0_4 = arith.constant 0 : index
    %4 = vector.load %arg3[%c0_3, %c0_4] : memref<32x32xf32, #tpu.memory_space<vmem>>, vector<32x32xf32>
    tpu.vector_store %arg3[%c0_3, %c0_4], %3 {strides = array<i32>} : memref<32x32xf32, #tpu.memory_space<vmem>>, vector<32x32xf32>,
    %5 = vector.extract_strided_slice %2 {offsets = [0, 32], sizes = [32, 32], strides = [1, 1]} : vector<32x64xf32> to vector<32x32xf32>
    %c0_5 = arith.constant 0 : index
    %c0_6 = arith.constant 0 : index
    %6 = vector.load %arg4[%c0_5, %c0_6] : memref<32x32xf32, #tpu.memory_space<vmem>>, vector<32x32xf32>
    tpu.vector_store %arg4[%c0_5, %c0_6], %5 {strides = array<i32>} : memref<32x32xf32, #tpu.memory_space<vmem>>, vector<32x32xf32>,
    return
  }
  func.func @transform_0(%arg0: i32) -> (i32, i32) {
    %c0_i32 = arith.constant 0 : i32
    %c0_i32_0 = arith.constant 0 : i32
    return %arg0, %c0_i32 : i32, i32
  }
  func.func @transform_1(%arg0: i32) -> (i32, i32) {
    %c0_i32 = arith.constant 0 : i32
    %c0_i32_0 = arith.constant 0 : i32
    %c0_i32_1 = arith.constant 0 : i32
    return %c0_i32, %c0_i32_0 : i32, i32
  }
  func.func @transform_2(%arg0: i32) -> (i32, i32) {
    %c0_i32 = arith.constant 0 : i32
    %c0_i32_0 = arith.constant 0 : i32
    return %arg0, %c0_i32 : i32, i32
  }
  func.func @transform_3(%arg0: i32) -> (i32, i32) {
    %c0_i32 = arith.constant 0 : i32
    %c0_i32_0 = arith.constant 0 : i32
    return %arg0, %c0_i32 : i32, i32
  }
}

</mosaic_0001>

<llo_original>
// kernel: tpu_custom_call.1
$region0: #{tpu_custom_call.1}
  #allocation0 [shape = 'u32[]', space=smem, size = 0x4, offset = 0x4, fixed_abs, tag = 'smem constant byte address 0x4 - core index']
  #allocation1 [shape = 'u32[144,128]{1,0:T(1,128)}', space=vmem, size = 0x12000, scoped, tag = 'internal scratch']
  %s0 = inlined_call_operand.hbm [shape: f32[32,32], index: 0, kind: input, shape index: {}]
  %s1 = inlined_call_operand.hbm [shape: f32[32,64], index: 1, kind: input, shape index: {}]
  %s2 = inlined_call_operand.hbm [shape: f32[32,32], index: 2, kind: output, shape index: {0}]
  %s3 = inlined_call_operand.hbm [shape: f32[32,32], index: 3, kind: output, shape index: {1}]
  %4 = xla_tuple %s2, %s3
  %s5 = sld [smem:[#allocation0]]
  $region34: #{tpu_custom_call.1} parent=0
    _
  %s7 = ssub.s32 1, %s5
  %s8 = scalar_select 0, %s7, %s5
  $region1: #{tpu_custom_call.1} parent=0
    #allocation2 [shape = 'u8[16384]{0}', space=vmem, size = 0x4000, scoped, tag = 'input window, operand 0, single buffered']
    #allocation3 [shape = 's32[1]{0}', space=sflag, size = 0x4, scoped, tag = 'scoped memory for tpu_custom_call.1']
    #allocation4 [shape = 's32[1]{0}', space=sflag, size = 0x4, scoped, tag = 'scoped memory for tpu_custom_call.1']
    #allocation5 [shape = 'u8[16384]{0}', space=vmem, size = 0x4000, scoped, tag = 'input window, operand 1, single buffered']
    #allocation6 [shape = 's32[1]{0}', space=sflag, size = 0x4, scoped, tag = 'scoped memory for tpu_custom_call.1']
    #allocation7 [shape = 'u8[16384]{0}', space=vmem, size = 0x4000, scoped, tag = 'output window, operand 0, single buffered']
    #allocation8 [shape = 'u8[16384]{0}', space=vmem, size = 0x4000, scoped, tag = 'output window, operand 1, single buffered']
    #allocation9 [shape = 's32[1]{0}', space=sflag, size = 0x4, scoped, tag = 'scoped memory for tpu_custom_call.1']
    %9 = vsyncpa [#allocation3], 0
    %10 = vsyncpa [#allocation6], 0
    %11 = vsyncpa [#allocation4], 0
    %12 = vsyncpa [#allocation9], 0
    // Predicated region
    $region2: #{tpu_custom_call.1} parent=1 // pred_check
      _
    $region3: #{tpu_custom_call.1} parent=1 // pred_check_branch
      %14 = sbr.rel (0) target = $region5
    $region4: #{tpu_custom_call.1} parent=1 // pred_region
      %s16 = ssub.s32 512, 512
      %17 = vsyncadd [#allocation3], %s16
      %s18 = sshll.u32 [#allocation2], 4
      %s19 = int_to_ptr.vmem [resolvable:$true] %s18
      %24 = dma.hbm_to_vmem [thread:$0]  %s0, 512, %s19, [#allocation3], 128, 128, 8
    $region5: #{tpu_custom_call.1} parent=1 // pred_fallthru
      _
    // Predicated region
    $region6: #{tpu_custom_call.1} parent=1 // pred_check
      _
    $region7: #{tpu_custom_call.1} parent=1 // pred_check_branch
      %26 = sbr.rel (0) target = $region9
    $region8: #{tpu_custom_call.1} parent=1 // pred_region
      %s28 = ssub.s32 512, 512
      %29 = vsyncadd [#allocation6], %s28
      %s30 = sshll.u32 [#allocation5], 4
      %s31 = int_to_ptr.vmem [resolvable:$true] %s30
      %36 = dma.hbm_to_vmem [thread:$0]  %s1, 512, %s31, [#allocation6], 128, 128, 8
    $region9: #{tpu_custom_call.1} parent=1 // pred_fallthru
      _
    // Predicated region
    $region10: #{tpu_custom_call.1} parent=1 // pred_check
      _
    $region11: #{tpu_custom_call.1} parent=1 // pred_check_branch
      %38 = sbr.rel (0) target = $region13
    $region12: #{tpu_custom_call.1} parent=1 // pred_region
      %39 = dma.done [#allocation3], 512
    $region13: #{tpu_custom_call.1} parent=1 // pred_fallthru
      _
    // Predicated region
    $region14: #{tpu_custom_call.1} parent=1 // pred_check
      _
    $region15: #{tpu_custom_call.1} parent=1 // pred_check_branch
      %41 = sbr.rel (0) target = $region17
    $region16: #{tpu_custom_call.1} parent=1 // pred_region
      %42 = dma.done [#allocation6], 512
    $region17: #{tpu_custom_call.1} parent=1 // pred_fallthru
      _
    %v43 = vld [vmem:[#allocation2] sm:$0xff]
    %v44 = vld [vmem:[#allocation2 + $0x8] sm:$0xff]
    %v45 = vld [vmem:[#allocation2 + $0x10] sm:$0xff]
    %v46 = vld [vmem:[#allocation2 + $0x18] sm:$0xff]
    %v47 = vld [vmem:[#allocation5] sm:$0xff]
    %v48 = vld [vmem:[#allocation5 + $0x8] sm:$0xff]
    %v49 = vld [vmem:[#allocation5 + $0x10] sm:$0xff]
    %v50 = vld [vmem:[#allocation5 + $0x18] sm:$0xff]
    %vm51 = vcmask 261120
    %v53 = vsel %vm51, %v43, 0
    %v56 = vsel %vm51, %v44, 0
    %v59 = vsel %vm51, %v45, 0
    %v62 = vsel %vm51, %v46, 0
    %64 = vmatprep.subr.mxu0 0.0
    %65 = vmatpush1.msra.mxu0 %v47
    %66 = vmatprep.subr.mxu0 0.0
    %67 = vmatpush1.msra.mxu0 %v48
    %68 = vmatprep.subr.mxu0 0.0
    %69 = vmatpush1.msra.mxu0 %v49
    %70 = vmatprep.subr.mxu0 0.0
    %71 = vmatpush1.msra.mxu0 %v50
    %72 = vmatprep.subr.mxu0 0.0
    %73 = vmatpush1.msra.mxu0 0.0
    %74 = vmatprep.subr.mxu0 0.0
    %75 = vmatpush1.msra.mxu0 0.0
    %76 = vmatprep.subr.mxu0 0.0
    %77 = vmatpush1.msra.mxu0 0.0
    %78 = vmatprep.subr.mxu0 0.0
    %79 = vmatpush1.msra.mxu0 0.0
    %80 = vmatprep.subr.mxu0 0.0
    %81 = vmatpush1.msra.mxu0 0.0
    %82 = vmatprep.subr.mxu0 0.0
    %83 = vmatpush1.msra.mxu0 0.0
    %84 = vmatprep.subr.mxu0 0.0
    %85 = vmatpush1.msra.mxu0 0.0
    %86 = vmatprep.subr.mxu0 0.0
    %87 = vmatpush1.msra.mxu0 0.0
    %88 = vmatprep.subr.mxu0 0.0
    %89 = vmatpush1.msra.mxu0 0.0
    %90 = vmatprep.subr.mxu0 0.0
    %91 = vmatpush1.msra.mxu0 0.0
    %92 = vmatprep.subr.mxu0 0.0
    %93 = vmatpush1.msra.mxu0 0.0
    %94 = vmatprep.subr.mxu0 0.0
    %95 = vmatpush1.msra.mxu0 0.0
    %96 = vmatprep.subr.mxu0 0.0
    %97 = vmatpush1.msra.mxu0 0.0
    %98 = vmatprep.subr.mxu0 0.0
    %99 = vmatpush1.msra.mxu0 0.0
    %100 = vmatprep.subr.mxu0 0.0
    %101 = vmatpush1.msra.mxu0 0.0
    %102 = vmatprep.subr.mxu0 0.0
    %103 = vmatpush1.msra.mxu0 0.0
    %104 = vmatprep.subr.mxu0 0.0
    %105 = vmatpush1.msra.mxu0 0.0
    %106 = vmatprep.subr.mxu0 0.0
    %107 = vmatpush1.msra.mxu0 0.0
    %108 = vmatprep.subr.mxu0 0.0
    %109 = vmatpush1.msra.mxu0 0.0
    %110 = vmatprep.subr.mxu0 0.0
    %111 = vmatpush1.msra.mxu0 0.0
    %112 = vmatprep.subr.mxu0 0.0
    %113 = vmatpush1.msra.mxu0 0.0
    %114 = vmatprep.subr.mxu0 0.0
    %115 = vmatpush1.msra.mxu0 0.0
    %116 = vmatprep.subr.mxu0 0.0
    %117 = vmatpush1.msra.mxu0 0.0
    %118 = vmatprep.subr.mxu0 0.0
    %119 = vmatpush1.msra.mxu0 0.0
    %120 = vmatprep.subr.mxu0 0.0
    %121 = vmatpush1.msra.mxu0 0.0
    %122 = vmatprep.subr.mxu0 0.0
    %123 = vmatpush1.msra.mxu0 0.0
    %124 = vmatprep.subr.mxu0 0.0
    %125 = vmatpush1.msra.mxu0 0.0
    %126 = vmatprep.subr.mxu0 0.0
    %127 = vmatpush1.msra.mxu0 0.0
    %128 = vmatprep.mubr.f32.mxu0 0.0
    %129 = vmatmul.mubr.f32.gmra.mrb[0].mxu0 %v53
    %v130 = vpop.f32.mrb[0].mxu0
    %v131 = vadd.f32 0.0, %v130
    %v132 = vpop.f32.mrb[0].mxu0
    %133 = vmatprep.mubr.f32.mxu0 0.0
    %134 = vmatmul.mubr.f32.gmra.mrb[0].mxu0 %v56
    %v135 = vpop.f32.mrb[0].mxu0
    %v136 = vadd.f32 0.0, %v135
    %v137 = vpop.f32.mrb[0].mxu0
    %138 = vmatprep.mubr.f32.mxu0 0.0
    %139 = vmatmul.mubr.f32.gmra.mrb[0].mxu0 %v59
    %v140 = vpop.f32.mrb[0].mxu0
    %v141 = vadd.f32 0.0, %v140
    %v142 = vpop.f32.mrb[0].mxu0
    %143 = vmatprep.mubr.f32.mxu0 0.0
    %144 = vmatmul.mubr.f32.gmra.mrb[0].mxu0 %v62
    %v145 = vpop.f32.mrb[0].mxu0
    %v146 = vadd.f32 0.0, %v145
    %v147 = vpop.f32.mrb[0].mxu0
    %148 = vdwg.mxu0
    %149 = vst.msk [vmem:[#allocation7] sm:$0xff] %vm51, %v131
    %150 = vst.msk [vmem:[#allocation7 + $0x8] sm:$0xff] %vm51, %v136
    %151 = vst.msk [vmem:[#allocation7 + $0x10] sm:$0xff] %vm51, %v141
    %152 = vst.msk [vmem:[#allocation7 + $0x18] sm:$0xff] %vm51, %v146
    %157 = vrot.lane.b32.xlu0 %v131, 96
    %v158 = vpop.permute.xlu0 %157
    %159 = vrot.lane.b32.xlu0 %v136, 96
    %v160 = vpop.permute.xlu0 %159
    %161 = vrot.lane.b32.xlu0 %v141, 96
    %v162 = vpop.permute.xlu0 %161
    %163 = vrot.lane.b32.xlu0 %v146, 96
    %v164 = vpop.permute.xlu0 %163
    %169 = vst.msk [vmem:[#allocation8] sm:$0xff] %vm51, %v158
    %170 = vst.msk [vmem:[#allocation8 + $0x8] sm:$0xff] %vm51, %v160
    %171 = vst.msk [vmem:[#allocation8 + $0x10] sm:$0xff] %vm51, %v162
    %172 = vst.msk [vmem:[#allocation8 + $0x18] sm:$0xff] %vm51, %v164
    // Predicated region
    $region18: #{tpu_custom_call.1} parent=1 // pred_check
      _
    $region19: #{tpu_custom_call.1} parent=1 // pred_check_branch
      %174 = sbr.rel (0) target = $region21
    $region20: #{tpu_custom_call.1} parent=1 // pred_region
      %s176 = ssub.s32 512, 512
      %177 = vsyncadd [#allocation4], %s176
      %s178 = sshll.u32 [#allocation7], 4
      %s179 = int_to_ptr.vmem [resolvable:$true] %s178
      %184 = dma.vmem_to_hbm [thread:$0]  %s179, 512, %s2, [#allocation4], 128, 128, 8
    $region21: #{tpu_custom_call.1} parent=1 // pred_fallthru
      _
    // Predicated region
    $region22: #{tpu_custom_call.1} parent=1 // pred_check
      _
    $region23: #{tpu_custom_call.1} parent=1 // pred_check_branch
      %186 = sbr.rel (0) target = $region25
    $region24: #{tpu_custom_call.1} parent=1 // pred_region
      %s188 = ssub.s32 512, 512
      %189 = vsyncadd [#allocation9], %s188
      %s190 = sshll.u32 [#allocation8], 4
      %s191 = int_to_ptr.vmem [resolvable:$true] %s190
      %196 = dma.vmem_to_hbm [thread:$0]  %s191, 512, %s3, [#allocation9], 128, 128, 8
    $region25: #{tpu_custom_call.1} parent=1 // pred_fallthru
      _
    // Predicated region
    $region26: #{tpu_custom_call.1} parent=1 // pred_check
      _
    $region27: #{tpu_custom_call.1} parent=1 // pred_check_branch
      %198 = sbr.rel (0) target = $region29
    $region28: #{tpu_custom_call.1} parent=1 // pred_region
      %199 = dma.done [#allocation4], 512
    $region29: #{tpu_custom_call.1} parent=1 // pred_fallthru
      _
    // Predicated region
    $region30: #{tpu_custom_call.1} parent=1 // pred_check
      _
    $region31: #{tpu_custom_call.1} parent=1 // pred_check_branch
      %201 = sbr.rel (0) target = $region33
    $region32: #{tpu_custom_call.1} parent=1 // pred_region
      %202 = dma.done [#allocation9], 512
    $region33: #{tpu_custom_call.1} parent=1 // pred_fallthru
      _
    %203 = vsyncpa [#allocation3], 1
    %204 = vsyncpa [#allocation6], 1
    %205 = vsyncpa [#allocation4], 1
    %206 = vsyncpa [#allocation9], 1

</llo_original>
